<compile_context>
chip_gen: v6e
topology: v6e:2x2x1
jax: 0.10.0
libtpu: 0.0.40
codegen_flags: <defaults>
</compile_context>

<pallas_src>
import math

import jax
import jax.numpy as jnp
from jax import lax
from jax.experimental import pallas as pl
from jax.experimental.pallas import tpu as pltpu

LANE = 128  # pad small head outputs to this many lanes (lane-dense stores)


def _pick_tile(n, max_tile=512):
    """Largest power-of-two row tile <= max_tile that divides n (else n)."""
    for t in (512, 256, 128, 64, 32, 16, 8):
        if t <= max_tile and n % t == 0:
            return t
    return n


# --------------------------------------------------------------------------
# Kernel 1: fused backbone-pointwise-projection + input_proj (Conv3d k=1)
#           + positional-embedding add.  memory = x @ W_fold + b_fold + pos
# --------------------------------------------------------------------------
def _embed_kernel(x_ref, pos_ref, w_ref, b_ref, o_ref):
    # x_ref: [1, tile, cin], pos_ref: [tile, hidden], w: [cin, hidden]
    o_ref[0] = (
        jnp.dot(x_ref[0], w_ref[...], preferred_element_type=jnp.float32)
        + b_ref[...]
        + pos_ref[...]
    )


def embed_project(x_rows, pos_rows, w_fold, b_fold):
    bs, r, cin = x_rows.shape
    hidden = w_fold.shape[1]
    tile = _pick_tile(r)
    return pl.pallas_call(
        _embed_kernel,
        out_shape=jax.ShapeDtypeStruct((bs, r, hidden), jnp.float32),
        grid=(bs, r // tile),
        in_specs=[
            pl.BlockSpec((1, tile, cin), lambda b, i: (b, i, 0)),
            pl.BlockSpec((tile, hidden), lambda b, i: (i, 0)),
            pl.BlockSpec((cin, hidden), lambda b, i: (0, 0)),
            pl.BlockSpec((1, hidden), lambda b, i: (0, 0)),
        ],
        out_specs=pl.BlockSpec((1, tile, hidden), lambda b, i: (b, i, 0)),
        compiler_params=pltpu.CompilerParams(
            dimension_semantics=("parallel", "parallel")),
    )(x_rows, pos_rows, w_fold, b_fold.reshape(1, hidden))


# --------------------------------------------------------------------------
# Kernel 2: fused dual-stream single-head cross-attention (decoder stub),
#           KV-tiled with online softmax.  Both query streams share the same
#           memory; K/V of both heads come from one [d, 4d] matmul per tile.
# --------------------------------------------------------------------------
def fused_cross_attention(q1, q2, memory, attn1, attn2, *, tkv=128):
    bs, s, d = memory.shape
    nq = q1.shape[0]
    wq1, wk1, wv1, wo1 = attn1
    wq2, wk2, wv2, wo2 = attn2
    wkv = jnp.concatenate([wk1, wv1, wk2, wv2], axis=1)  # [d, 4d]
    if s % tkv != 0:
        tkv = s
    scale = 1.0 / math.sqrt(d)

    def kernel(q1_ref, q2_ref, mem_ref, wq1_ref, wq2_ref, wkv_ref,
               wo1_ref, wo2_ref, o1_ref, o2_ref,
               q1p_sc, q2p_sc, m1_sc, l1_sc, acc1_sc, m2_sc, l2_sc, acc2_sc):
        kv_i = pl.program_id(1)

        @pl.when(kv_i == 0)
        def _init():
            # Project queries once per batch step (scale folded in).
            q1p_sc[...] = jnp.dot(
                q1_ref[...].astype(jnp.bfloat16),
                wq1_ref[...].astype(jnp.bfloat16),
                preferred_element_type=jnp.float32) * scale
            q2p_sc[...] = jnp.dot(
                q2_ref[...].astype(jnp.bfloat16),
                wq2_ref[...].astype(jnp.bfloat16),
                preferred_element_type=jnp.float32) * scale
            m1_sc[...] = jnp.full(m1_sc.shape, -jnp.inf, jnp.float32)
            l1_sc[...] = jnp.zeros(l1_sc.shape, jnp.float32)
            acc1_sc[...] = jnp.zeros(acc1_sc.shape, jnp.float32)
            m2_sc[...] = jnp.full(m2_sc.shape, -jnp.inf, jnp.float32)
            l2_sc[...] = jnp.zeros(l2_sc.shape, jnp.float32)
            acc2_sc[...] = jnp.zeros(acc2_sc.shape, jnp.float32)

        mem = mem_ref[0]  # [tkv, d]
        # One lane-dense projection of the shared memory tile: K1|V1|K2|V2.
        kvp = jnp.dot(mem.astype(jnp.bfloat16),
                      wkv_ref[...].astype(jnp.bfloat16),
                      preferred_element_type=jnp.float32)  # [tkv, 4d]
        k1, v1 = kvp[:, :d], kvp[:, d:2 * d]
        k2, v2 = kvp[:, 2 * d:3 * d], kvp[:, 3 * d:]

        def stream(qp, k, v, m_sc, l_sc, acc_sc):
            # Contract last dims directly — no explicit transpose of k.
            sc = lax.dot_general(
                qp.astype(jnp.bfloat16), k.astype(jnp.bfloat16),
                (((1,), (1,)), ((), ())),
                preferred_element_type=jnp.float32)            # [nq, tkv]
            m_new = jnp.maximum(m_sc[...], jnp.max(sc, axis=-1, keepdims=True))
            alpha = jnp.exp(m_sc[...] - m_new)
            p = jnp.exp(sc - m_new)
            l_sc[...] = alpha * l_sc[...] + jnp.sum(p, axis=-1, keepdims=True)
            acc_sc[...] = alpha * acc_sc[...] + jnp.dot(
                p.astype(jnp.bfloat16), v.astype(jnp.bfloat16),
                preferred_element_type=jnp.float32)
            m_sc[...] = m_new

        stream(q1p_sc[...], k1, v1, m1_sc, l1_sc, acc1_sc)
        stream(q2p_sc[...], k2, v2, m2_sc, l2_sc, acc2_sc)

        @pl.when(kv_i == pl.num_programs(1) - 1)
        def _finalize():
            # One reciprocal per query row instead of per-element division.
            a1 = (acc1_sc[...] * (1.0 / l1_sc[...])).astype(jnp.bfloat16)
            o1_ref[0] = jnp.dot(a1, wo1_ref[...].astype(jnp.bfloat16),
                                preferred_element_type=jnp.float32)
            a2 = (acc2_sc[...] * (1.0 / l2_sc[...])).astype(jnp.bfloat16)
            o2_ref[0] = jnp.dot(a2, wo2_ref[...].astype(jnp.bfloat16),
                                preferred_element_type=jnp.float32)

    o1, o2 = pl.pallas_call(
        kernel,
        out_shape=(jax.ShapeDtypeStruct((bs, nq, d), jnp.float32),
                   jax.ShapeDtypeStruct((bs, nq, d), jnp.float32)),
        grid=(bs, s // tkv),
        in_specs=[
            pl.BlockSpec((nq, d), lambda b, k: (0, 0)),      # q1 (unbatched)
            pl.BlockSpec((nq, d), lambda b, k: (0, 0)),      # q2 (unbatched)
            pl.BlockSpec((1, tkv, d), lambda b, k: (b, k, 0)),  # memory tile
            pl.BlockSpec((d, d), lambda b, k: (0, 0)),       # wq1
            pl.BlockSpec((d, d), lambda b, k: (0, 0)),       # wq2
            pl.BlockSpec((d, 4 * d), lambda b, k: (0, 0)),   # wk1|wv1|wk2|wv2
            pl.BlockSpec((d, d), lambda b, k: (0, 0)),       # wo1
            pl.BlockSpec((d, d), lambda b, k: (0, 0)),       # wo2
        ],
        out_specs=(pl.BlockSpec((1, nq, d), lambda b, k: (b, 0, 0)),
                   pl.BlockSpec((1, nq, d), lambda b, k: (b, 0, 0))),
        scratch_shapes=[
            pltpu.VMEM((nq, d), jnp.float32),   # q1 projected
            pltpu.VMEM((nq, d), jnp.float32),   # q2 projected
            pltpu.VMEM((nq, 1), jnp.float32),   # m1
            pltpu.VMEM((nq, 1), jnp.float32),   # l1
            pltpu.VMEM((nq, d), jnp.float32),   # acc1
            pltpu.VMEM((nq, 1), jnp.float32),   # m2
            pltpu.VMEM((nq, 1), jnp.float32),   # l2
            pltpu.VMEM((nq, d), jnp.float32),   # acc2
        ],
        compiler_params=pltpu.CompilerParams(
            dimension_semantics=("parallel", "arbitrary")),
    )(q1, q2, memory, wq1, wq2, wkv, wo1, wo2)
    return o1, o2


# --------------------------------------------------------------------------
# Kernel 3: fused detection heads, row-tiled.
#   bbox:  sigmoid(MLP3(hs) + inverse_sigmoid(reference))   (output padded 128)
#   class: (dropout-mask * hs2) @ Wc + bc                    (output padded 128)
# --------------------------------------------------------------------------
def _heads_kernel(hs_ref, hs2_ref, ref_ref, mask_ref,
                  w1_ref, b1_ref, w2_ref, b2_ref, w3_ref, b3_ref,
                  wc_ref, bc_ref, coord_ref, logit_ref):
    x = hs_ref[...]
    h = jnp.maximum(
        jnp.dot(x.astype(jnp.bfloat16), w1_ref[...].astype(jnp.bfloat16),
                preferred_element_type=jnp.float32) + b1_ref[...], 0.0)
    h = jnp.maximum(
        jnp.dot(h.astype(jnp.bfloat16), w2_ref[...].astype(jnp.bfloat16),
                preferred_element_type=jnp.float32) + b2_ref[...], 0.0)
    t = (jnp.dot(h.astype(jnp.bfloat16), w3_ref[...].astype(jnp.bfloat16),
                 preferred_element_type=jnp.float32)
         + b3_ref[...] + ref_ref[...])
    coord_ref[...] = jax.nn.sigmoid(t)

    x2 = hs2_ref[...] * mask_ref[...]          # dropout as fused scale-mask
    logit_ref[...] = (
        jnp.dot(x2.astype(jnp.bfloat16), wc_ref[...].astype(jnp.bfloat16),
                preferred_element_type=jnp.float32) + bc_ref[...])


def detection_heads(hs_flat, hs2_flat, ref_pad, drop_mask, params):
    n, d = hs_flat.shape
    nc = params["class_w"].shape[1]
    tile = _pick_tile(n, 256)
    # Pad narrow output heads (4 box coords, nc classes) up to 128 lanes so the
    # stores are lane-dense; slice the real columns back out in the wrapper.
    w3p = jnp.pad(params["bbox_w3"], ((0, 0), (0, LANE - 4)))
    b3p = jnp.pad(params["bbox_b3"], ((0, LANE - 4),)).reshape(1, LANE)
    wcp = jnp.pad(params["class_w"], ((0, 0), (0, LANE - nc)))
    bcp = jnp.pad(params["class_b"], ((0, LANE - nc),)).reshape(1, LANE)

    coord_pad, logit_pad = pl.pallas_call(
        _heads_kernel,
        out_shape=(jax.ShapeDtypeStruct((n, LANE), jnp.float32),
                   jax.ShapeDtypeStruct((n, LANE), jnp.float32)),
        grid=(n // tile,),
        in_specs=[
            pl.BlockSpec((tile, d), lambda i: (i, 0)),      # hs rows
            pl.BlockSpec((tile, d), lambda i: (i, 0)),      # hs2 rows
            pl.BlockSpec((tile, LANE), lambda i: (i, 0)),   # inv-sigmoid ref (padded)
            pl.BlockSpec((tile, d), lambda i: (i, 0)),      # dropout scale-mask
            pl.BlockSpec((d, d), lambda i: (0, 0)),         # bbox w1
            pl.BlockSpec((1, d), lambda i: (0, 0)),         # bbox b1
            pl.BlockSpec((d, d), lambda i: (0, 0)),         # bbox w2
            pl.BlockSpec((1, d), lambda i: (0, 0)),         # bbox b2
            pl.BlockSpec((d, LANE), lambda i: (0, 0)),      # bbox w3 (padded)
            pl.BlockSpec((1, LANE), lambda i: (0, 0)),      # bbox b3 (padded)
            pl.BlockSpec((d, LANE), lambda i: (0, 0)),      # class w (padded)
            pl.BlockSpec((1, LANE), lambda i: (0, 0)),      # class b (padded)
        ],
        out_specs=(pl.BlockSpec((tile, LANE), lambda i: (i, 0)),
                   pl.BlockSpec((tile, LANE), lambda i: (i, 0))),
        compiler_params=pltpu.CompilerParams(dimension_semantics=("parallel",)),
    )(hs_flat, hs2_flat, ref_pad, drop_mask,
      params["bbox_w1"], params["bbox_b1"].reshape(1, d),
      params["bbox_w2"], params["bbox_b2"].reshape(1, d),
      w3p, b3p, wcp, bcp)
    return coord_pad[:, :4], logit_pad[:, :nc]


# --------------------------------------------------------------------------
# JAX glue (shapes / parameter plumbing), mirroring DETR.forward semantics.
# --------------------------------------------------------------------------
def inverse_sigmoid(x, eps=1e-3):
    x = jnp.clip(x, 0.0, 1.0)
    x1 = jnp.maximum(x, eps)
    x2 = jnp.maximum(1.0 - x, eps)
    return jnp.log(x1 / x2)


def detr_forward(samples, params, cfg):
    training = cfg.get("training", True)
    bs, c, t, H, W = samples.shape
    hidden = cfg["hidden_dim"]
    nc = cfg["num_classes"]

    # ---- backbone stub: NCDHW -> NDHWC, stride-2 spatial average pool ----
    x = jnp.transpose(samples, (0, 2, 3, 4, 1))                       # NDHWC
    h2, w2 = H // 2, W // 2
    x = x.reshape(bs, t, h2, 2, w2, 2, c).mean(axis=(3, 5))           # [bs,t,h2,w2,3]
    r = t * h2 * w2
    x_rows = x.reshape(bs, r, c)

    # ---- fold backbone projection + input_proj (Conv3d k=1) and fuse `+pos`:
    #      memory = x @ (Wb @ Wproj) + (bb @ Wproj + bproj) + pos  (one kernel)
    w_fold = params["backbone_w"] @ params["input_proj_w"]            # [3, hidden]
    b_fold = params["backbone_b"] @ params["input_proj_w"] + params["input_proj_b"]
    pos_rows = params["pos_embed"].reshape(r, hidden)
    memory = embed_project(x_rows, pos_rows, w_fold, b_fold)          # Pallas

    # ---- transformer decoder stub: fused dual-stream cross-attention ----
    embedweight = params["refpoint_embed"]                            # [nqT, 4]
    sub_embedweight = params["subrefpoint_embed"]
    q1 = jnp.tanh(embedweight @ params["wref1"])                      # [nqT, hidden]
    q2 = jnp.tanh(sub_embedweight @ params["wref2"])
    hs0, hs2_0 = fused_cross_attention(q1, q2, memory,
                                       params["attn1"], params["attn2"])  # Pallas
    hs = jnp.stack([jnp.tanh(hs0), hs0], axis=0)                      # 2 decoder "layers"
    hs2 = jnp.stack([jnp.tanh(hs2_0), hs2_0], axis=0)

    nq_t = embedweight.shape[0]
    reference = jnp.broadcast_to(jax.nn.sigmoid(embedweight)[None], (bs, nq_t, 4))

    # ---- fused bbox / class heads ----
    num_layers = hs.shape[0]
    n = num_layers * bs * nq_t
    hs_flat = hs.reshape(n, hidden)
    hs2_flat = hs2.reshape(n, hidden)
    ref_bs = inverse_sigmoid(reference)                               # [bs, nqT, 4]
    ref_flat = jnp.broadcast_to(ref_bs[None], (num_layers, bs, nq_t, 4)).reshape(n, 4)
    ref_pad = jnp.pad(ref_flat, ((0, 0), (0, LANE - 4)))

    if training:
        # TODO(synk): pltpu.prng_random_bits would generate this mask on-chip but
        # has no interpret/CPU lowering; the keep-mask is built host-side instead
        # and the scale+mask multiply stays fused inside the head kernel.
        keep = jax.random.bernoulli(
            jax.random.PRNGKey(cfg["dropout_seed"]), 0.5, (n, hidden))
        drop_mask = jnp.where(keep, 2.0, 0.0).astype(jnp.float32)     # 1/(1-p)=2
    else:
        drop_mask = jnp.ones((n, hidden), jnp.float32)

    coord_flat, logits_flat = detection_heads(
        hs_flat, hs2_flat, ref_pad, drop_mask, params)                # Pallas
    outputs_coord = coord_flat.reshape(num_layers, bs, nq_t, 4)
    outputs_class = logits_flat.reshape(num_layers, bs, nq_t, nc)

    # dataset_mode == 'ava': pick the central temporal frame
    nq, tl = cfg["num_queries"], cfg["temporal_length"]
    outputs_class = outputs_class.reshape(-1, bs, nq, tl, nc)[..., tl // 2, :]
    outputs_coord = outputs_coord.reshape(-1, bs, nq, tl, 4)[..., tl // 2, :]
    return {"pred_logits": outputs_class[-1], "pred_boxes": outputs_coord[-1]}


# --------------------------------------------------------------------------
# Deterministic parameter construction (shapes from DETR.__init__)
# --------------------------------------------------------------------------
def make_params(key, cfg):
    ks = jax.random.split(key, 16)
    hd = cfg["hidden_dim"]
    nc_backbone = cfg["backbone_channels"]
    nq_t = cfg["num_queries"] * cfg["temporal_length"]
    sp = cfg["spatial"] // 2

    def nrm(k, shape, scale=0.02):
        return (scale * jax.random.normal(k, shape)).astype(jnp.float32)

    bias_value = -math.log((1 - 0.01) / 0.01)  # class_embed prior bias
    params = {
        # backbone stub
        "backbone_w": nrm(ks[0], (3, nc_backbone), 0.2),
        "backbone_b": jnp.zeros((nc_backbone,), jnp.float32),
        "pos_embed": nrm(ks[1], (1, cfg["num_frames"], sp, sp, hd), 0.02),
        # input_proj: Conv3d(num_channels, hidden, k=1) -> [Cin, Cout], bias 0
        "input_proj_w": nrm(ks[2], (nc_backbone, hd), 1.0 / math.sqrt(nc_backbone)),
        "input_proj_b": jnp.zeros((hd,), jnp.float32),
        # anchor / sub-anchor embeddings
        "refpoint_embed": nrm(ks[3], (nq_t, 4), 1.0),
        "subrefpoint_embed": nrm(ks[4], (nq_t, 4), 1.0),
        # transformer stub
        "wref1": nrm(ks[5], (4, hd), 0.5),
        "wref2": nrm(ks[6], (4, hd), 0.5),
        "attn1": tuple(nrm(k, (hd, hd), 1.0 / math.sqrt(hd))
                       for k in jax.random.split(ks[7], 4)),
        "attn2": tuple(nrm(k, (hd, hd), 1.0 / math.sqrt(hd))
                       for k in jax.random.split(ks[8], 4)),
        # bbox_embed MLP(hidden, hidden, 4, 3); last layer zero-initialized
        "bbox_w1": nrm(ks[9], (hd, hd), 1.0 / math.sqrt(hd)),
        "bbox_b1": jnp.zeros((hd,), jnp.float32),
        "bbox_w2": nrm(ks[10], (hd, hd), 1.0 / math.sqrt(hd)),
        "bbox_b2": jnp.zeros((hd,), jnp.float32),
        "bbox_w3": jnp.zeros((hd, 4), jnp.float32),
        "bbox_b3": jnp.zeros((4,), jnp.float32),
        # class_embed (ava: Linear(hidden, num_classes)) with prior-prob bias
        "class_w": nrm(ks[11], (hd, cfg["num_classes"]), 1.0 / math.sqrt(hd)),
        "class_b": jnp.full((cfg["num_classes"],), bias_value, jnp.float32),
    }
    return params


if __name__ == "__main__":
    cfg = dict(
        hidden_dim=128,          # lane-dense hidden size
        num_classes=8,
        num_queries=4,
        temporal_length=4,
        num_frames=4,
        backbone_channels=16,
        spatial=16,
        dropout_seed=1234,
        training=True,           # module default (self.training = True)
    )
    key = jax.random.PRNGKey(0)
    k_param, k_in = jax.random.split(key)
    params = make_params(k_param, cfg)

    # samples: [batch, 3, T, H, W] (NCDHW like PyTorch)
    samples = jax.random.normal(k_in, (2, 3, 4, 16, 16), dtype=jnp.float32)

    out = detr_forward(samples, params, cfg)
    out = jax.block_until_ready(out)

    assert out["pred_logits"].shape == (2, cfg["num_queries"], cfg["num_classes"])
    assert out["pred_boxes"].shape == (2, cfg["num_queries"], 4)
    assert bool(jnp.all(jnp.isfinite(out["pred_logits"])))
    assert bool(jnp.all((out["pred_boxes"] >= 0.0) & (out["pred_boxes"] <= 1.0)))
    print("KERNEL_OK")
</pallas_src>

<mosaic_0001>
module attributes {stable_mosaic.version = 11 : i64} {
  func.func @_embed_kernel(%arg0: i32, %arg1: i32, %arg2: memref<1x256x3xf32, #tpu.memory_space<vmem>>, %arg3: memref<256x128xf32, #tpu.memory_space<vmem>>, %arg4: memref<3x128xf32, #tpu.memory_space<vmem>>, %arg5: memref<1x128xf32, #tpu.memory_space<vmem>>, %arg6: memref<1x256x128xf32, #tpu.memory_space<vmem>>) attributes {dimension_semantics = [#tpu.dimension_semantics<parallel>, #tpu.dimension_semantics<parallel>], iteration_bounds = array<i64: 2, 1>, scalar_prefetch = 0 : i64, scratch_operands = 0 : i64, tpu.core_type = #tpu.core_type<tc>, window_params = [{transform_indices = @transform_0, window_bounds = array<i64: 1, 256, 3>}, {transform_indices = @transform_1, window_bounds = array<i64: 256, 128>}, {pipeline_mode = #tpu.pipeline_mode<synchronous>, transform_indices = @transform_2, window_bounds = array<i64: 3, 128>}, {pipeline_mode = #tpu.pipeline_mode<synchronous>, transform_indices = @transform_3, window_bounds = array<i64: 1, 128>}, {transform_indices = @transform_4, window_bounds = array<i64: 1, 256, 128>}]} {
    %c0 = arith.constant 0 : index
    %c0_0 = arith.constant 0 : index
    %c0_1 = arith.constant 0 : index
    %0 = vector.load %arg2[%c0, %c0_0, %c0_1] : memref<1x256x3xf32, #tpu.memory_space<vmem>>, vector<1x256x3xf32>
    %1 = vector.shape_cast %0 : vector<1x256x3xf32> to vector<256x3xf32>
    %c0_2 = arith.constant 0 : index
    %c0_3 = arith.constant 0 : index
    %2 = vector.load %arg4[%c0_2, %c0_3] : memref<3x128xf32, #tpu.memory_space<vmem>>, vector<3x128xf32>
    %cst = arith.constant dense<0.000000e+00> : vector<256x128xf32>
    %3 = tpu.matmul %1, %2, %cst {dimension_numbers = #tpu.dot_dimension_numbers<[1], [0], [0], [1], [0, 0, 1, 1], [], []>} : vector<256x3xf32>, vector<3x128xf32>, vector<256x128xf32> -> vector<256x128xf32>
    %c0_4 = arith.constant 0 : index
    %c0_5 = arith.constant 0 : index
    %4 = vector.load %arg5[%c0_4, %c0_5] : memref<1x128xf32, #tpu.memory_space<vmem>>, vector<1x128xf32>
    %5 = vector.broadcast %4 : vector<1x128xf32> to vector<256x128xf32>
    %6 = arith.addf %3, %5 : vector<256x128xf32>
    %c0_6 = arith.constant 0 : index
    %c0_7 = arith.constant 0 : index
    %7 = vector.load %arg3[%c0_6, %c0_7] : memref<256x128xf32, #tpu.memory_space<vmem>>, vector<256x128xf32>
    %8 = arith.addf %6, %7 : vector<256x128xf32>
    %c0_8 = arith.constant 0 : index
    %c0_9 = arith.constant 0 : index
    %c0_10 = arith.constant 0 : index
    %9 = vector.load %arg6[%c0_8, %c0_9, %c0_10] : memref<1x256x128xf32, #tpu.memory_space<vmem>>, vector<1x256x128xf32>
    %10 = vector.shape_cast %9 : vector<1x256x128xf32> to vector<256x128xf32>
    %11 = vector.shape_cast %8 : vector<256x128xf32> to vector<1x256x128xf32>
    tpu.vector_store %arg6[%c0_8, %c0_9, %c0_10], %11 {strides = array<i32>} : memref<1x256x128xf32, #tpu.memory_space<vmem>>, vector<1x256x128xf32>,
    return
  }
  func.func @transform_0(%arg0: i32, %arg1: i32) -> (i32, i32, i32) {
    %c0_i32 = arith.constant 0 : i32
    %c0_i32_0 = arith.constant 0 : i32
    return %arg0, %arg1, %c0_i32 : i32, i32, i32
  }
  func.func @transform_1(%arg0: i32, %arg1: i32) -> (i32, i32) {
    %c0_i32 = arith.constant 0 : i32
    %c0_i32_0 = arith.constant 0 : i32
    return %arg1, %c0_i32 : i32, i32
  }
  func.func @transform_2(%arg0: i32, %arg1: i32) -> (i32, i32) {
    %c0_i32 = arith.constant 0 : i32
    %c0_i32_0 = arith.constant 0 : i32
    %c0_i32_1 = arith.constant 0 : i32
    return %c0_i32, %c0_i32_0 : i32, i32
  }
  func.func @transform_3(%arg0: i32, %arg1: i32) -> (i32, i32) {
    %c0_i32 = arith.constant 0 : i32
    %c0_i32_0 = arith.constant 0 : i32
    %c0_i32_1 = arith.constant 0 : i32
    return %c0_i32, %c0_i32_0 : i32, i32
  }
  func.func @transform_4(%arg0: i32, %arg1: i32) -> (i32, i32, i32) {
    %c0_i32 = arith.constant 0 : i32
    %c0_i32_0 = arith.constant 0 : i32
    return %arg0, %arg1, %c0_i32 : i32, i32, i32
  }
}

</mosaic_0001>

<llo_original>
// kernel: tpu_custom_call.1
$region0: #{tpu_custom_call.1}
  #allocation0 [shape = 'u32[]', space=smem, size = 0x4, offset = 0x4, fixed_abs, tag = 'smem constant byte address 0x4 - core index']
  #allocation1 [shape = 'u32[144,128]{1,0:T(1,128)}', space=vmem, size = 0x12000, scoped, tag = 'internal scratch']
  %s0 = inlined_call_operand.vmem [shape: f32[2,256,3], index: 0, kind: input, shape index: {}]
  %s1 = inlined_call_operand.vmem [shape: f32[256,128], index: 1, kind: input, shape index: {}]
  %s2 = inlined_call_operand.vmem [shape: f32[3,128], index: 2, kind: input, shape index: {}]
  %s3 = inlined_call_operand.vmem [shape: f32[1,128], index: 3, kind: input, shape index: {}]
  %s4 = inlined_call_operand.hbm [shape: f32[2,256,128], index: 4, kind: output, shape index: {}]
  %s5 = sld [smem:[#allocation0]]
  $region49: #{tpu_custom_call.1} parent=0
    _
  %s7 = ssub.s32 1, %s5
  %s8 = scalar_select 0, %s7, %s5
  $region1: #{tpu_custom_call.1} parent=0
    #allocation2 [shape = 'u8[262144]{0}', space=vmem, size = 0x40000, scoped, tag = 'output window, operand 0']
    #allocation3 [shape = 's32[2]{0}', space=sflag, size = 0x8, scoped, tag = 'scoped memory for tpu_custom_call.1']
    %9 = vsyncpa [#allocation3], 0
    %s10 = scalar_lea.sflag [#allocation3], 1
    %11 = vsyncpa %s10, 0
    loop: start=0, step=1, limit=4
    $region2: #{tpu_custom_call.1} parent=1 // loop_pre_header
      _
    $region3: #{tpu_custom_call.1} parent=1 // loop_header
      %s13 = sphi 0, %s17
      %p14 = scmp.ge.s32.totalorder %s13, 4
      %s20 = sphi 0, %s32
      %s21 = sphi 0, %s28
      %s22 = sphi 0, %s20
      %s23 = sphi 0, %s21
      %s24 = sphi 0, %s22
      %s25 = sphi 0, %s23
      %s37 = sphi 0, %s39
      %s40 = sphi 0, %s37
      %s41 = sphi 0, %s40
      %s57 = sphi 0, %s41
      %s63 = sphi 0, %s65
      %s66 = sphi 0, %s63
      %s67 = sphi 0, %s66
      %s83 = sphi 0, %s67
      %s87 = sphi 0, %s87
      %s89 = sphi 0, %s87
      %s90 = sphi 0, %s89
      %s104 = sphi 0, %s90
      %s108 = sphi 0, %s108
      %s110 = sphi 0, %s108
      %s111 = sphi 0, %s110
      %s125 = sphi 0, %s111
      %s133 = sphi 0, %s135
      %s136 = sphi 0, %s133
      %s137 = sphi 0, %s136
      %s153 = sphi 0, %s137
    $region4: #{tpu_custom_call.1} parent=1 // loop_header_branch
      %16 = sbr.rel (%p14) target = $region8
    $region5: #{tpu_custom_call.1} parent=1 // loop_body
      %s18 = ssub.s32 %s13, 1
      %s19 = ssub.s32 %s13, 2
      %s26 = sadd.s32 1, %s21
      %p27 = scmp.ge.s32.totalorder %s26, 1
      %s28 = scalar_select %p27, 0, %s26
      %s29 = sadd.s32 1, %s20
      %s30 = scalar_select %p27, %s29, %s20
      %p31 = scmp.ge.s32.totalorder %s30, 2
      %s32 = scalar_select %p31, 0, %s30
      %s33 = ssub.s32 %s20, %s32
      %s34 = ssub.s32 %s21, %s28
      %s35 = sor.u32 %s33, %s34
      %p36 = scmp.eq.s32.totalorder %s35, 0
      %s38 = sadd.s32 %s37, 1
      %s39 = scalar_select %p36, %s37, %s38
      %p42 = pneg %p36
      %p43 = scmp.eq.s32.totalorder %s13, 1
      %p44 = por %p42, %p43
      %p45 = scmp.ne.s32.totalorder %s37, %s40
      %p46 = scmp.eq.s32.totalorder %s13, 0
      %p47 = por %p45, %p46
      %p48 = scmp.ne.s32.totalorder %s37, %s40
      %p49 = scmp.eq.s32.totalorder %s18, 1
      %p50 = por %p48, %p49
      %p51 = scmp.ne.s32.totalorder %s40, %s41
      %p52 = scmp.eq.s32.totalorder %s18, 0
      %p53 = por %p51, %p52
      %p54 = scmp.ne.s32.totalorder %s40, %s41
      %p55 = scmp.eq.s32.totalorder %s19, 1
      %p56 = por %p54, %p55
      %p58 = scmp.ne.s32.totalorder %s41, %s57
      %p59 = scmp.eq.s32.totalorder %s19, 0
      %p60 = por %p58, %p59
      %s61 = ssub.s32 %s21, %s28
      %p62 = scmp.eq.s32.totalorder %s61, 0
      %s64 = sadd.s32 %s63, 1
      %s65 = scalar_select %p62, %s63, %s64
      %p68 = pneg %p62
      %p69 = scmp.eq.s32.totalorder %s13, 1
      %p70 = por %p68, %p69
      %p71 = scmp.ne.s32.totalorder %s63, %s66
      %p72 = scmp.eq.s32.totalorder %s13, 0
      %p73 = por %p71, %p72
      %p74 = scmp.ne.s32.totalorder %s63, %s66
      %p75 = scmp.eq.s32.totalorder %s18, 1
      %p76 = por %p74, %p75
      %p77 = scmp.ne.s32.totalorder %s66, %s67
      %p78 = scmp.eq.s32.totalorder %s18, 0
      %p79 = por %p77, %p78
      %p80 = scmp.ne.s32.totalorder %s66, %s67
      %p81 = scmp.eq.s32.totalorder %s19, 1
      %p82 = por %p80, %p81
      %p84 = scmp.ne.s32.totalorder %s67, %s83
      %p85 = scmp.eq.s32.totalorder %s19, 0
      %p86 = por %p84, %p85
      %s88 = sadd.s32 %s87, 1
      %p91 = scmp.eq.s32.totalorder %s13, 1
      %p92 = scmp.ne.s32.totalorder %s87, %s89
      %p93 = scmp.eq.s32.totalorder %s13, 0
      %p94 = por %p92, %p93
      %p95 = scmp.ne.s32.totalorder %s87, %s89
      %p96 = scmp.eq.s32.totalorder %s18, 1
      %p97 = por %p95, %p96
      %p98 = scmp.ne.s32.totalorder %s89, %s90
      %p99 = scmp.eq.s32.totalorder %s18, 0
      %p100 = por %p98, %p99
      %p101 = scmp.ne.s32.totalorder %s89, %s90
      %p102 = scmp.eq.s32.totalorder %s19, 1
      %p103 = por %p101, %p102
      %p105 = scmp.ne.s32.totalorder %s90, %s104
      %p106 = scmp.eq.s32.totalorder %s19, 0
      %p107 = por %p105, %p106
      %s109 = sadd.s32 %s108, 1
      %p112 = scmp.eq.s32.totalorder %s13, 1
      %p113 = scmp.ne.s32.totalorder %s108, %s110
      %p114 = scmp.eq.s32.totalorder %s13, 0
      %p115 = por %p113, %p114
      %p116 = scmp.ne.s32.totalorder %s108, %s110
      %p117 = scmp.eq.s32.totalorder %s18, 1
      %p118 = por %p116, %p117
      %p119 = scmp.ne.s32.totalorder %s110, %s111
      %p120 = scmp.eq.s32.totalorder %s18, 0
      %p121 = por %p119, %p120
      %p122 = scmp.ne.s32.totalorder %s110, %s111
      %p123 = scmp.eq.s32.totalorder %s19, 1
      %p124 = por %p122, %p123
      %p126 = scmp.ne.s32.totalorder %s111, %s125
      %p127 = scmp.eq.s32.totalorder %s19, 0
      %p128 = por %p126, %p127
      %s129 = ssub.s32 %s20, %s32
      %s130 = ssub.s32 %s21, %s28
      %s131 = sor.u32 %s129, %s130
      %p132 = scmp.eq.s32.totalorder %s131, 0
      %s134 = sadd.s32 %s133, 1
      %s135 = scalar_select %p132, %s133, %s134
      %p138 = pneg %p132
      %p139 = scmp.eq.s32.totalorder %s13, 1
      %p140 = por %p138, %p139
      %p141 = scmp.ne.s32.totalorder %s133, %s136
      %p142 = scmp.eq.s32.totalorder %s13, 0
      %p143 = por %p141, %p142
      %p144 = scmp.ne.s32.totalorder %s133, %s136
      %p145 = scmp.eq.s32.totalorder %s18, 1
      %p146 = por %p144, %p145
      %p147 = scmp.ne.s32.totalorder %s136, %s137
      %p148 = scmp.eq.s32.totalorder %s18, 0
      %p149 = por %p147, %p148
      %p150 = scmp.ne.s32.totalorder %s136, %s137
      %p151 = scmp.eq.s32.totalorder %s19, 1
      %p152 = por %p150, %p151
      %p154 = scmp.ne.s32.totalorder %s137, %s153
      %p155 = scmp.eq.s32.totalorder %s19, 0
      %p156 = por %p154, %p155
      %p157 = scmp.le.s32.totalorder 1, %s13
      %p158 = scmp.lt.s32.totalorder %s13, 3
      %p159 = pnand %p157, %p158
      %p160 = pneg %p159
      // Predicated region
      $region9: #{tpu_custom_call.1} parent=5 // pred_check
        _
      $region10: #{tpu_custom_call.1} parent=5 // pred_check_branch
        %162 = sbr.rel (%p159) target = $region12
      $region11: #{tpu_custom_call.1} parent=5 // pred_region
        %s163 = ssub.s32 %s13, 1
        // Predicated region
        $region13: #{tpu_custom_call.1} parent=11 // pred_check
          %p164 = pneg %p79
        $region14: #{tpu_custom_call.1} parent=11 // pred_check_branch
          %166 = sbr.rel (%p164) target = $region16
        $region15: #{tpu_custom_call.1} parent=11 // pred_region
          %s167 = smul.u32 32, %s23
          %p168 = scmp.lt.s32.totalorder %s167, 31
          %s169 = scalar_select %p168, %s167, 31
          %s170 = smul.addr %s169, 8
          %s171 = scalar_lea.vmem %s1, %s170
          %s172 = smul.u32 32, %s23
        $region16: #{tpu_custom_call.1} parent=11 // pred_fallthru
          _
        // Predicated region
        $region17: #{tpu_custom_call.1} parent=11 // pred_check
          %p173 = pneg %p100
        $region18: #{tpu_custom_call.1} parent=11 // pred_check_branch
          %175 = sbr.rel (%p173) target = $region20
        $region19: #{tpu_custom_call.1} parent=11 // pred_region
          _
        $region20: #{tpu_custom_call.1} parent=11 // pred_fallthru
          _
        // Predicated region
        $region21: #{tpu_custom_call.1} parent=11 // pred_check
          %p176 = pneg %p121
        $region22: #{tpu_custom_call.1} parent=11 // pred_check_branch
          %178 = sbr.rel (%p176) target = $region24
        $region23: #{tpu_custom_call.1} parent=11 // pred_region
          _
        $region24: #{tpu_custom_call.1} parent=11 // pred_fallthru
          _
      $region12: #{tpu_custom_call.1} parent=5 // pred_fallthru
        _
      %p179 = scmp.lt.s32.totalorder %s13, 2
      // Predicated region
      $region25: #{tpu_custom_call.1} parent=5 // pred_check
        %p180 = pneg %p179
      $region26: #{tpu_custom_call.1} parent=5 // pred_check_branch
        %182 = sbr.rel (%p180) target = $region28
      $region27: #{tpu_custom_call.1} parent=5 // pred_region
        // Predicated region
        $region29: #{tpu_custom_call.1} parent=27 // pred_check
          %p183 = pneg %p47
        $region30: #{tpu_custom_call.1} parent=27 // pred_check_branch
          %185 = sbr.rel (%p183) target = $region32
        $region31: #{tpu_custom_call.1} parent=27 // pred_region
          %s186 = smul.u32 32, %s21
          %p187 = scmp.lt.s32.totalorder %s20, 1
          %s188 = scalar_select %p187, %s20, 1
          %p189 = scmp.lt.s32.totalorder %s186, 31
          %s190 = scalar_select %p189, %s186, 31
          %s191 = smul.addr %s188, 32
          %s192 = sadd.s32 %s190, %s191
          %s193 = smul.addr %s192, 8
          %s194 = scalar_lea.vmem %s0, %s193
          %s195 = smul.u32 32, %s21
        $region32: #{tpu_custom_call.1} parent=27 // pred_fallthru
          _
      $region28: #{tpu_custom_call.1} parent=5 // pred_fallthru
        _
      %p196 = scmp.le.s32.totalorder 1, %s13
      %p197 = scmp.lt.s32.totalorder %s13, 3
      %p198 = pnand %p196, %p197
      %p199 = pneg %p198
      // Predicated region
      $region33: #{tpu_custom_call.1} parent=5 // pred_check
        _
      $region34: #{tpu_custom_call.1} parent=5 // pred_check_branch
        %201 = sbr.rel (%p198) target = $region36
      $region35: #{tpu_custom_call.1} parent=5 // pred_region
        %s202 = ssub.s32 %s13, 1
        %s203 = smul.u32 32, %s23
        %p204 = scmp.lt.s32.totalorder %s22, 1
        %s205 = scalar_select %p204, %s22, 1
        %p206 = scmp.lt.s32.totalorder %s203, 31
        %s207 = scalar_select %p206, %s203, 31
        %s208 = smul.addr %s205, 32
        %s209 = sadd.s32 %s207, %s208
        %s210 = smul.addr %s209, 8
        %s211 = scalar_lea.vmem %s0, %s210
        %p212 = pneg %p53
        %p213 = pneg %p50
        %s214 = smul.u32 32, %s23
        %p215 = scmp.lt.s32.totalorder %s214, 31
        %s216 = scalar_select %p215, %s214, 31
        %s217 = smul.addr %s216, 8
        %s218 = scalar_lea.vmem %s1, %s217
        %p219 = pneg %p79
        %p220 = pneg %p76
        %p221 = pneg %p100
        %p222 = pneg %p97
        %p223 = pneg %p121
        %p224 = pneg %p118
        %p225 = pneg %p149
        %p226 = pneg %p146
        %s227 = sand.u32 %s136, 1
        %s228 = scalar_lea.sflag [#allocation3], %s227
        %s229 = sand.u32 %s136, 1
        %s230 = smul.addr %s229, 256
        %s231 = scalar_lea.vmem [#allocation2], %s230
        %s232 = smul.u32 32, %s23
        %p233 = scmp.lt.s32.totalorder %s22, 1
        %s234 = scalar_select %p233, %s22, 1
        %p235 = scmp.lt.s32.totalorder %s232, 31
        %s236 = scalar_select %p235, %s232, 31
        %s237 = smul.addr %s234, 32
        %s238 = sadd.s32 %s236, %s237
        %s239 = smul.addr %s238, 8
        %s240 = scalar_lea.vmem %s0, %s239
        %s241 = smul.u32 32, %s23
        %s242 = smul.u32 32, %s23
        %p243 = scmp.lt.s32.totalorder %s242, 31
        %s244 = scalar_select %p243, %s242, 31
        %s245 = smul.addr %s244, 8
        %s246 = scalar_lea.vmem %s1, %s245
        %s247 = smul.u32 32, %s23
        %s248 = smul.u32 32, %s23
        %v249 = vld [vmem:[%s240] sm:$0xff]
        %v250 = vld [vmem:[%s240 + $0x8] sm:$0xff]
        %v251 = vld [vmem:[%s240 + $0x10] sm:$0xff]
        %v252 = vld [vmem:[%s240 + $0x18] sm:$0xff]
        %v253 = vld [vmem:[%s240 + $0x20] sm:$0xff]
        %v254 = vld [vmem:[%s240 + $0x28] sm:$0xff]
        %v255 = vld [vmem:[%s240 + $0x30] sm:$0xff]
        %v256 = vld [vmem:[%s240 + $0x38] sm:$0xff]
        %v257 = vld [vmem:[%s240 + $0x40] sm:$0xff]
        %v258 = vld [vmem:[%s240 + $0x48] sm:$0xff]
        %v259 = vld [vmem:[%s240 + $0x50] sm:$0xff]
        %v260 = vld [vmem:[%s240 + $0x58] sm:$0xff]
        %v261 = vld [vmem:[%s240 + $0x60] sm:$0xff]
        %v262 = vld [vmem:[%s240 + $0x68] sm:$0xff]
        %v263 = vld [vmem:[%s240 + $0x70] sm:$0xff]
        %v264 = vld [vmem:[%s240 + $0x78] sm:$0xff]
        %v265 = vld [vmem:[%s240 + $0x80] sm:$0xff]
        %v266 = vld [vmem:[%s240 + $0x88] sm:$0xff]
        %v267 = vld [vmem:[%s240 + $0x90] sm:$0xff]
        %v268 = vld [vmem:[%s240 + $0x98] sm:$0xff]
        %v269 = vld [vmem:[%s240 + $0xa0] sm:$0xff]
        %v270 = vld [vmem:[%s240 + $0xa8] sm:$0xff]
        %v271 = vld [vmem:[%s240 + $0xb0] sm:$0xff]
        %v272 = vld [vmem:[%s240 + $0xb8] sm:$0xff]
        %v273 = vld [vmem:[%s240 + $0xc0] sm:$0xff]
        %v274 = vld [vmem:[%s240 + $0xc8] sm:$0xff]
        %v275 = vld [vmem:[%s240 + $0xd0] sm:$0xff]
        %v276 = vld [vmem:[%s240 + $0xd8] sm:$0xff]
        %v277 = vld [vmem:[%s240 + $0xe0] sm:$0xff]
        %v278 = vld [vmem:[%s240 + $0xe8] sm:$0xff]
        %v279 = vld [vmem:[%s240 + $0xf0] sm:$0xff]
        %v280 = vld [vmem:[%s240 + $0xf8] sm:$0xff]
        %v281 = vld [vmem:[%s2] sm:$0x7]
        %v282 = vld [vmem:[%s3] sm:$0x1]
        %v284 = vlaneseq
        %v285 = vshrl.u32 %v284, 7
        %v286 = vsub.s32 0, %v285
        %v287 = vrot.slane %v282, %v286
        %vm289 = vcmask 23552
        %v291 = vsel %vm289, %v249, 0
        %v294 = vsel %vm289, %v250, 0
        %v297 = vsel %vm289, %v251, 0
        %v300 = vsel %vm289, %v252, 0
        %v303 = vsel %vm289, %v253, 0
        %v306 = vsel %vm289, %v254, 0
        %v309 = vsel %vm289, %v255, 0
        %v312 = vsel %vm289, %v256, 0
        %v315 = vsel %vm289, %v257, 0
        %v318 = vsel %vm289, %v258, 0
        %v321 = vsel %vm289, %v259, 0
        %v324 = vsel %vm289, %v260, 0
        %v327 = vsel %vm289, %v261, 0
        %v330 = vsel %vm289, %v262, 0
        %v333 = vsel %vm289, %v263, 0
        %v336 = vsel %vm289, %v264, 0
        %v339 = vsel %vm289, %v265, 0
        %v342 = vsel %vm289, %v266, 0
        %v345 = vsel %vm289, %v267, 0
        %v348 = vsel %vm289, %v268, 0
        %v351 = vsel %vm289, %v269, 0
        %v354 = vsel %vm289, %v270, 0
        %v357 = vsel %vm289, %v271, 0
        %v360 = vsel %vm289, %v272, 0
        %v363 = vsel %vm289, %v273, 0
        %v366 = vsel %vm289, %v274, 0
        %v369 = vsel %vm289, %v275, 0
        %v372 = vsel %vm289, %v276, 0
        %v375 = vsel %vm289, %v277, 0
        %v378 = vsel %vm289, %v278, 0
        %v381 = vsel %vm289, %v279, 0
        %v384 = vsel %vm289, %v280, 0
        %vm386 = vcmask 1042432
        %v388 = vsel %vm386, %v281, 0
        %390 = vmatprep.subr.mxu0 0.0
        %391 = vmatpush1.msra.mxu0 0.0
        %392 = vmatprep.subr.mxu0 0.0
        %393 = vmatpush1.msra.mxu0 0.0
        %394 = vmatprep.subr.mxu0 0.0
        %395 = vmatpush1.msra.mxu0 0.0
        %396 = vmatprep.subr.mxu0 0.0
        %397 = vmatpush1.msra.mxu0 0.0
        %398 = vmatprep.subr.mxu0 0.0
        %399 = vmatpush1.msra.mxu0 0.0
        %400 = vmatprep.subr.mxu0 0.0
        %401 = vmatpush1.msra.mxu0 0.0
        %402 = vmatprep.subr.mxu0 0.0
        %403 = vmatpush1.msra.mxu0 0.0
        %404 = vmatprep.subr.mxu0 0.0
        %405 = vmatpush1.msra.mxu0 0.0
        %406 = vmatprep.subr.mxu0 0.0
        %407 = vmatpush1.msra.mxu0 0.0
        %408 = vmatprep.subr.mxu0 0.0
        %409 = vmatpush1.msra.mxu0 0.0
        %410 = vmatprep.subr.mxu0 0.0
        %411 = vmatpush1.msra.mxu0 0.0
        %412 = vmatprep.subr.mxu0 0.0
        %413 = vmatpush1.msra.mxu0 0.0
        %414 = vmatprep.subr.mxu0 0.0
        %415 = vmatpush1.msra.mxu0 0.0
        %416 = vmatprep.subr.mxu0 0.0
        %417 = vmatpush1.msra.mxu0 0.0
        %418 = vmatprep.subr.mxu0 0.0
        %419 = vmatpush1.msra.mxu0 0.0
        %420 = vmatprep.subr.mxu0 0.0
        %421 = vmatpush1.msra.mxu0 %v388
        %422 = vmatprep.subr.mxu0 0.0
        %423 = vmatpush2.msra.mxu0 0.0
        %424 = vmatprep.subr.mxu0 0.0
        %425 = vmatpush2.msra.mxu0 0.0
        %426 = vmatprep.subr.mxu0 0.0
        %427 = vmatpush2.msra.mxu0 0.0
        %428 = vmatprep.subr.mxu0 0.0
        %429 = vmatpush2.msra.mxu0 0.0
        %430 = vmatprep.subr.mxu0 0.0
        %431 = vmatpush2.msra.mxu0 0.0
        %432 = vmatprep.subr.mxu0 0.0
        %433 = vmatpush2.msra.mxu0 0.0
        %434 = vmatprep.subr.mxu0 0.0
        %435 = vmatpush2.msra.mxu0 0.0
        %436 = vmatprep.subr.mxu0 0.0
        %437 = vmatpush2.msra.mxu0 0.0
        %438 = vmatprep.subr.mxu0 0.0
        %439 = vmatpush2.msra.mxu0 0.0
        %440 = vmatprep.subr.mxu0 0.0
        %441 = vmatpush2.msra.mxu0 0.0
        %442 = vmatprep.subr.mxu0 0.0
        %443 = vmatpush2.msra.mxu0 0.0
        %444 = vmatprep.subr.mxu0 0.0
        %445 = vmatpush2.msra.mxu0 0.0
        %446 = vmatprep.subr.mxu0 0.0
        %447 = vmatpush2.msra.mxu0 0.0
        %448 = vmatprep.subr.mxu0 0.0
        %449 = vmatpush2.msra.mxu0 0.0
        %450 = vmatprep.subr.mxu0 0.0
        %451 = vmatpush2.msra.mxu0 0.0
        %452 = vmatprep.subr.mxu0 0.0
        %453 = vmatpush2.msra.mxu0 0.0
        %454 = vmatprep.mubr.f32.mxu0 0.0
        %455 = vmatmul.mubr.f32.gmra.mxu0 %v291
        %v456 = vpop.f32.mrf.mxu0
        %v457 = vadd.f32 %v287, %v456
        %v458 = vpop.f32.mrf.mxu0
        %459 = vmatprep.mubr.f32.mxu0 0.0
        %460 = vmatmul.mubr.f32.gmra.mxu0 %v294
        %v461 = vpop.f32.mrf.mxu0
        %v462 = vadd.f32 %v287, %v461
        %v463 = vpop.f32.mrf.mxu0
        %464 = vmatprep.mubr.f32.mxu0 0.0
        %465 = vmatmul.mubr.f32.gmra.mxu0 %v297
        %v466 = vpop.f32.mrf.mxu0
        %v467 = vadd.f32 %v287, %v466
        %v468 = vpop.f32.mrf.mxu0
        %469 = vmatprep.mubr.f32.mxu0 0.0
        %470 = vmatmul.mubr.f32.gmra.mxu0 %v300
        %v471 = vpop.f32.mrf.mxu0
        %v472 = vadd.f32 %v287, %v471
        %v473 = vpop.f32.mrf.mxu0
        %474 = vmatprep.mubr.f32.mxu0 0.0
        %475 = vmatmul.mubr.f32.gmra.mxu0 %v303
        %v476 = vpop.f32.mrf.mxu0
        %v477 = vadd.f32 %v287, %v476
        %v478 = vpop.f32.mrf.mxu0
        %479 = vmatprep.mubr.f32.mxu0 0.0
        %480 = vmatmul.mubr.f32.gmra.mxu0 %v306
        %v481 = vpop.f32.mrf.mxu0
        %v482 = vadd.f32 %v287, %v481
        %v483 = vpop.f32.mrf.mxu0
        %484 = vmatprep.mubr.f32.mxu0 0.0
        %485 = vmatmul.mubr.f32.gmra.mxu0 %v309
        %v486 = vpop.f32.mrf.mxu0
        %v487 = vadd.f32 %v287, %v486
        %v488 = vpop.f32.mrf.mxu0
        %489 = vmatprep.mubr.f32.mxu0 0.0
        %490 = vmatmul.mubr.f32.gmra.mxu0 %v312
        %v491 = vpop.f32.mrf.mxu0
        %v492 = vadd.f32 %v287, %v491
        %v493 = vpop.f32.mrf.mxu0
        %494 = vmatprep.mubr.f32.mxu0 0.0
        %495 = vmatmul.mubr.f32.gmra.mxu0 %v315
        %v496 = vpop.f32.mrf.mxu0
        %v497 = vadd.f32 %v287, %v496
        %v498 = vpop.f32.mrf.mxu0
        %499 = vmatprep.mubr.f32.mxu0 0.0
        %500 = vmatmul.mubr.f32.gmra.mxu0 %v318
        %v501 = vpop.f32.mrf.mxu0
        %v502 = vadd.f32 %v287, %v501
        %v503 = vpop.f32.mrf.mxu0
        %504 = vmatprep.mubr.f32.mxu0 0.0
        %505 = vmatmul.mubr.f32.gmra.mxu0 %v321
        %v506 = vpop.f32.mrf.mxu0
        %v507 = vadd.f32 %v287, %v506
        %v508 = vpop.f32.mrf.mxu0
        %509 = vmatprep.mubr.f32.mxu0 0.0
        %510 = vmatmul.mubr.f32.gmra.mxu0 %v324
        %v511 = vpop.f32.mrf.mxu0
        %v512 = vadd.f32 %v287, %v511
        %v513 = vpop.f32.mrf.mxu0
        %514 = vmatprep.mubr.f32.mxu0 0.0
        %515 = vmatmul.mubr.f32.gmra.mxu0 %v327
        %v516 = vpop.f32.mrf.mxu0
        %v517 = vadd.f32 %v287, %v516
        %v518 = vpop.f32.mrf.mxu0
        %519 = vmatprep.mubr.f32.mxu0 0.0
        %520 = vmatmul.mubr.f32.gmra.mxu0 %v330
        %v521 = vpop.f32.mrf.mxu0
        %v522 = vadd.f32 %v287, %v521
        %v523 = vpop.f32.mrf.mxu0
        %524 = vmatprep.mubr.f32.mxu0 0.0
        %525 = vmatmul.mubr.f32.gmra.mxu0 %v333
        %v526 = vpop.f32.mrf.mxu0
        %v527 = vadd.f32 %v287, %v526
        %v528 = vpop.f32.mrf.mxu0
        %529 = vmatprep.mubr.f32.mxu0 0.0
        %530 = vmatmul.mubr.f32.gmra.mxu0 %v336
        %v531 = vpop.f32.mrf.mxu0
        %v532 = vadd.f32 %v287, %v531
        %v533 = vpop.f32.mrf.mxu0
        %534 = vmatprep.mubr.f32.mxu0 0.0
        %535 = vmatmul.mubr.f32.gmra.mxu0 %v339
        %v536 = vpop.f32.mrf.mxu0
        %v537 = vadd.f32 %v287, %v536
        %v538 = vpop.f32.mrf.mxu0
        %539 = vmatprep.mubr.f32.mxu0 0.0
        %540 = vmatmul.mubr.f32.gmra.mxu0 %v342
        %v541 = vpop.f32.mrf.mxu0
        %v542 = vadd.f32 %v287, %v541
        %v543 = vpop.f32.mrf.mxu0
        %544 = vmatprep.mubr.f32.mxu0 0.0
        %545 = vmatmul.mubr.f32.gmra.mxu0 %v345
        %v546 = vpop.f32.mrf.mxu0
        %v547 = vadd.f32 %v287, %v546
        %v548 = vpop.f32.mrf.mxu0
        %549 = vmatprep.mubr.f32.mxu0 0.0
        %550 = vmatmul.mubr.f32.gmra.mxu0 %v348
        %v551 = vpop.f32.mrf.mxu0
        %v552 = vadd.f32 %v287, %v551
        %v553 = vpop.f32.mrf.mxu0
        %554 = vmatprep.mubr.f32.mxu0 0.0
        %555 = vmatmul.mubr.f32.gmra.mxu0 %v351
        %v556 = vpop.f32.mrf.mxu0
        %v557 = vadd.f32 %v287, %v556
        %v558 = vpop.f32.mrf.mxu0
        %559 = vmatprep.mubr.f32.mxu0 0.0
        %560 = vmatmul.mubr.f32.gmra.mxu0 %v354
        %v561 = vpop.f32.mrf.mxu0
        %v562 = vadd.f32 %v287, %v561
        %v563 = vpop.f32.mrf.mxu0
        %564 = vmatprep.mubr.f32.mxu0 0.0
        %565 = vmatmul.mubr.f32.gmra.mxu0 %v357
        %v566 = vpop.f32.mrf.mxu0
        %v567 = vadd.f32 %v287, %v566
        %v568 = vpop.f32.mrf.mxu0
        %569 = vmatprep.mubr.f32.mxu0 0.0
        %570 = vmatmul.mubr.f32.gmra.mxu0 %v360
        %v571 = vpop.f32.mrf.mxu0
        %v572 = vadd.f32 %v287, %v571
        %v573 = vpop.f32.mrf.mxu0
        %574 = vmatprep.mubr.f32.mxu0 0.0
        %575 = vmatmul.mubr.f32.gmra.mxu0 %v363
        %v576 = vpop.f32.mrf.mxu0
        %v577 = vadd.f32 %v287, %v576
        %v578 = vpop.f32.mrf.mxu0
        %579 = vmatprep.mubr.f32.mxu0 0.0
        %580 = vmatmul.mubr.f32.gmra.mxu0 %v366
        %v581 = vpop.f32.mrf.mxu0
        %v582 = vadd.f32 %v287, %v581
        %v583 = vpop.f32.mrf.mxu0
        %584 = vmatprep.mubr.f32.mxu0 0.0
        %585 = vmatmul.mubr.f32.gmra.mxu0 %v369
        %v586 = vpop.f32.mrf.mxu0
        %v587 = vadd.f32 %v287, %v586
        %v588 = vpop.f32.mrf.mxu0
        %589 = vmatprep.mubr.f32.mxu0 0.0
        %590 = vmatmul.mubr.f32.gmra.mxu0 %v372
        %v591 = vpop.f32.mrf.mxu0
        %v592 = vadd.f32 %v287, %v591
        %v593 = vpop.f32.mrf.mxu0
        %594 = vmatprep.mubr.f32.mxu0 0.0
        %595 = vmatmul.mubr.f32.gmra.mxu0 %v375
        %v596 = vpop.f32.mrf.mxu0
        %v597 = vadd.f32 %v287, %v596
        %v598 = vpop.f32.mrf.mxu0
        %599 = vmatprep.mubr.f32.mxu0 0.0
        %600 = vmatmul.mubr.f32.gmra.mxu0 %v378
        %v601 = vpop.f32.mrf.mxu0
        %v602 = vadd.f32 %v287, %v601
        %v603 = vpop.f32.mrf.mxu0
        %604 = vmatprep.mubr.f32.mxu0 0.0
        %605 = vmatmul.mubr.f32.gmra.mxu0 %v381
        %v606 = vpop.f32.mrf.mxu0
        %v607 = vadd.f32 %v287, %v606
        %v608 = vpop.f32.mrf.mxu0
        %609 = vmatprep.mubr.f32.mxu0 0.0
        %610 = vmatmul.mubr.f32.gmra.mxu0 %v384
        %v611 = vpop.f32.mrf.mxu0
        %v612 = vadd.f32 %v287, %v611
        %v613 = vpop.f32.mrf.mxu0
        %614 = vdwg.mxu0
        %v615 = vld [vmem:[%s246] sm:$0xff]
        %v616 = vld [vmem:[%s246 + $0x8] sm:$0xff]
        %v617 = vld [vmem:[%s246 + $0x10] sm:$0xff]
        %v618 = vld [vmem:[%s246 + $0x18] sm:$0xff]
        %v619 = vld [vmem:[%s246 + $0x20] sm:$0xff]
        %v620 = vld [vmem:[%s246 + $0x28] sm:$0xff]
        %v621 = vld [vmem:[%s246 + $0x30] sm:$0xff]
        %v622 = vld [vmem:[%s246 + $0x38] sm:$0xff]
        %v623 = vld [vmem:[%s246 + $0x40] sm:$0xff]
        %v624 = vld [vmem:[%s246 + $0x48] sm:$0xff]
        %v625 = vld [vmem:[%s246 + $0x50] sm:$0xff]
        %v626 = vld [vmem:[%s246 + $0x58] sm:$0xff]
        %v627 = vld [vmem:[%s246 + $0x60] sm:$0xff]
        %v628 = vld [vmem:[%s246 + $0x68] sm:$0xff]
        %v629 = vld [vmem:[%s246 + $0x70] sm:$0xff]
        %v630 = vld [vmem:[%s246 + $0x78] sm:$0xff]
        %v631 = vld [vmem:[%s246 + $0x80] sm:$0xff]
        %v632 = vld [vmem:[%s246 + $0x88] sm:$0xff]
        %v633 = vld [vmem:[%s246 + $0x90] sm:$0xff]
        %v634 = vld [vmem:[%s246 + $0x98] sm:$0xff]
        %v635 = vld [vmem:[%s246 + $0xa0] sm:$0xff]
        %v636 = vld [vmem:[%s246 + $0xa8] sm:$0xff]
        %v637 = vld [vmem:[%s246 + $0xb0] sm:$0xff]
        %v638 = vld [vmem:[%s246 + $0xb8] sm:$0xff]
        %v639 = vld [vmem:[%s246 + $0xc0] sm:$0xff]
        %v640 = vld [vmem:[%s246 + $0xc8] sm:$0xff]
        %v641 = vld [vmem:[%s246 + $0xd0] sm:$0xff]
        %v642 = vld [vmem:[%s246 + $0xd8] sm:$0xff]
        %v643 = vld [vmem:[%s246 + $0xe0] sm:$0xff]
        %v644 = vld [vmem:[%s246 + $0xe8] sm:$0xff]
        %v645 = vld [vmem:[%s246 + $0xf0] sm:$0xff]
        %v646 = vld [vmem:[%s246 + $0xf8] sm:$0xff]
        %v647 = vadd.f32 %v457, %v615
        %v648 = vadd.f32 %v462, %v616
        %v649 = vadd.f32 %v467, %v617
        %v650 = vadd.f32 %v472, %v618
        %v651 = vadd.f32 %v477, %v619
        %v652 = vadd.f32 %v482, %v620
        %v653 = vadd.f32 %v487, %v621
        %v654 = vadd.f32 %v492, %v622
        %v655 = vadd.f32 %v497, %v623
        %v656 = vadd.f32 %v502, %v624
        %v657 = vadd.f32 %v507, %v625
        %v658 = vadd.f32 %v512, %v626
        %v659 = vadd.f32 %v517, %v627
        %v660 = vadd.f32 %v522, %v628
        %v661 = vadd.f32 %v527, %v629
        %v662 = vadd.f32 %v532, %v630
        %v663 = vadd.f32 %v537, %v631
        %v664 = vadd.f32 %v542, %v632
        %v665 = vadd.f32 %v547, %v633
        %v666 = vadd.f32 %v552, %v634
        %v667 = vadd.f32 %v557, %v635
        %v668 = vadd.f32 %v562, %v636
        %v669 = vadd.f32 %v567, %v637
        %v670 = vadd.f32 %v572, %v638
        %v671 = vadd.f32 %v577, %v639
        %v672 = vadd.f32 %v582, %v640
        %v673 = vadd.f32 %v587, %v641
        %v674 = vadd.f32 %v592, %v642
        %v675 = vadd.f32 %v597, %v643
        %v676 = vadd.f32 %v602, %v644
        %v677 = vadd.f32 %v607, %v645
        %v678 = vadd.f32 %v612, %v646
        %679 = vst [vmem:[%s231] sm:$0xff] %v647
        %680 = vst [vmem:[%s231 + $0x8] sm:$0xff] %v648
        %681 = vst [vmem:[%s231 + $0x10] sm:$0xff] %v649
        %682 = vst [vmem:[%s231 + $0x18] sm:$0xff] %v650
        %683 = vst [vmem:[%s231 + $0x20] sm:$0xff] %v651
        %684 = vst [vmem:[%s231 + $0x28] sm:$0xff] %v652
        %685 = vst [vmem:[%s231 + $0x30] sm:$0xff] %v653
        %686 = vst [vmem:[%s231 + $0x38] sm:$0xff] %v654
        %687 = vst [vmem:[%s231 + $0x40] sm:$0xff] %v655
        %688 = vst [vmem:[%s231 + $0x48] sm:$0xff] %v656
        %689 = vst [vmem:[%s231 + $0x50] sm:$0xff] %v657
        %690 = vst [vmem:[%s231 + $0x58] sm:$0xff] %v658
        %691 = vst [vmem:[%s231 + $0x60] sm:$0xff] %v659
        %692 = vst [vmem:[%s231 + $0x68] sm:$0xff] %v660
        %693 = vst [vmem:[%s231 + $0x70] sm:$0xff] %v661
        %694 = vst [vmem:[%s231 + $0x78] sm:$0xff] %v662
        %695 = vst [vmem:[%s231 + $0x80] sm:$0xff] %v663
        %696 = vst [vmem:[%s231 + $0x88] sm:$0xff] %v664
        %697 = vst [vmem:[%s231 + $0x90] sm:$0xff] %v665
        %698 = vst [vmem:[%s231 + $0x98] sm:$0xff] %v666
        %699 = vst [vmem:[%s231 + $0xa0] sm:$0xff] %v667
        %700 = vst [vmem:[%s231 + $0xa8] sm:$0xff] %v668
        %701 = vst [vmem:[%s231 + $0xb0] sm:$0xff] %v669
        %702 = vst [vmem:[%s231 + $0xb8] sm:$0xff] %v670
        %703 = vst [vmem:[%s231 + $0xc0] sm:$0xff] %v671
        %704 = vst [vmem:[%s231 + $0xc8] sm:$0xff] %v672
        %705 = vst [vmem:[%s231 + $0xd0] sm:$0xff] %v673
        %706 = vst [vmem:[%s231 + $0xd8] sm:$0xff] %v674
        %707 = vst [vmem:[%s231 + $0xe0] sm:$0xff] %v675
        %708 = vst [vmem:[%s231 + $0xe8] sm:$0xff] %v676
        %709 = vst [vmem:[%s231 + $0xf0] sm:$0xff] %v677
        %710 = vst [vmem:[%s231 + $0xf8] sm:$0xff] %v678
        %s711 = sand.u32 %s136, 1
        %s712 = scalar_lea.sflag [#allocation3], %s711
        %s713 = sand.u32 %s136, 1
        %s714 = smul.addr %s713, 256
        %s715 = scalar_lea.vmem [#allocation2], %s714
        // Predicated region
        $region37: #{tpu_custom_call.1} parent=35 // pred_check
          %p716 = pneg %p146
        $region38: #{tpu_custom_call.1} parent=35 // pred_check_branch
          %718 = sbr.rel (%p716) target = $region40
        $region39: #{tpu_custom_call.1} parent=35 // pred_region
          %s719 = smul.u32 32, %s23
          %s721 = ssub.s32 4096, 4096
          %722 = vsyncadd %s712, %s721
          %s723 = smul.addr %s22, 32
          %s724 = sadd.s32 %s719, %s723
          %s725 = smul.addr %s724, 128
          %s726 = scalar_lea.hbm %s4, %s725
          %s727 = sshll.u32 %s715, 4
          %s728 = int_to_ptr.vmem [resolvable:$true] %s727
          %733 = dma.vmem_to_hbm [thread:$0]  %s728, 4096, %s726, %s712, 128, 128, 8
        $region40: #{tpu_custom_call.1} parent=35 // pred_fallthru
          _
      $region36: #{tpu_custom_call.1} parent=5 // pred_fallthru
        _
      %p734 = scmp.le.s32.totalorder 2, %s13
      // Predicated region
      $region41: #{tpu_custom_call.1} parent=5 // pred_check
        %p735 = pneg %p734
      $region42: #{tpu_custom_call.1} parent=5 // pred_check_branch
        %737 = sbr.rel (%p735) target = $region44
      $region43: #{tpu_custom_call.1} parent=5 // pred_region
        %s738 = ssub.s32 %s13, 2
        // Predicated region
        $region45: #{tpu_custom_call.1} parent=43 // pred_check
          %p739 = pneg %p152
        $region46: #{tpu_custom_call.1} parent=43 // pred_check_branch
          %741 = sbr.rel (%p739) target = $region48
        $region47: #{tpu_custom_call.1} parent=43 // pred_region
          %s742 = sand.u32 %s137, 1
          %s743 = scalar_lea.sflag [#allocation3], %s742
          %s744 = sand.u32 %s137, 1
          %s745 = smul.addr %s744, 256
          %s746 = scalar_lea.vmem [#allocation2], %s745
          %747 = dma.done %s743, 4096
        $region48: #{tpu_custom_call.1} parent=43 // pred_fallthru
          _
      $region44: #{tpu_custom_call.1} parent=5 // pred_fallthru
        _
    $region6: #{tpu_custom_call.1} parent=1 // loop_footer
      %s17 = sadd.s32 1, %s13
    $region7: #{tpu_custom_call.1} parent=1 // loop_footer_branch
      %12 = sbr.rel target = $region3
    $region8: #{tpu_custom_call.1} parent=1 // loop_exit
      _
    %748 = vsyncpa [#allocation3], 1
    %s749 = scalar_lea.sflag [#allocation3], 1
    %750 = vsyncpa %s749, 1

</llo_original>
